<compile_context>
chip_gen: v6e
topology: v6e:2x2x1
jax: 0.10.0
libtpu: 0.0.40
codegen_flags: <defaults>
</compile_context>

<pallas_src>
import math
from functools import partial

import jax
import jax.numpy as jnp
from jax import lax
from jax.experimental import pallas as pl
from jax.experimental.pallas import tpu as pltpu


VMEM_LIMIT = 64 * 1024 * 1024  # conservative: fits v7x's 64 MiB physical VMEM


def _pick_tile(dim, target):
    """Largest lane/sublane-friendly tile <= target that divides dim."""
    if dim <= target:
        return dim
    for cand in (1024, 512, 384, 256, 128, 64, 32, 16, 8):
        if cand <= target and dim % cand == 0:
            return cand
    return dim  # fall back to untiled along this dim


# ----------------------------------------------------------------------------
# Kernel 1: tiled y = x @ W + b      (x: (M, K), W: (K, N), b: (1, N))
# Standard P1 + P3 pattern: K is the reduction grid axis (last, "arbitrary"),
# accumulator lives in VMEM scratch, bias added at writeback.
# ----------------------------------------------------------------------------
def _linear_kernel(x_ref, w_ref, b_ref, o_ref, acc_ref):
    @pl.when(pl.program_id(2) == 0)
    def _init():
        acc_ref[...] = jnp.zeros_like(acc_ref)

    acc_ref[...] += jnp.dot(
        x_ref[...].astype(jnp.bfloat16),
        w_ref[...].astype(jnp.bfloat16),
        preferred_element_type=jnp.float32,
    )

    @pl.when(pl.program_id(2) == pl.num_programs(2) - 1)
    def _finalize():
        o_ref[...] = (acc_ref[...] + b_ref[...]).astype(o_ref.dtype)


def linear(x2d, w, b, *, tm=256, tn=256, tk=256):
    M, K = x2d.shape
    K2, N = w.shape
    assert K2 == K
    tm = _pick_tile(M, tm)
    tn = _pick_tile(N, tn)
    tk = _pick_tile(K, tk)
    grid = (M // tm, N // tn, K // tk)
    return pl.pallas_call(
        _linear_kernel,
        out_shape=jax.ShapeDtypeStruct((M, N), jnp.float32),
        grid=grid,
        in_specs=[
            pl.BlockSpec((tm, tk), lambda i, j, k: (i, k)),
            pl.BlockSpec((tk, tn), lambda i, j, k: (k, j)),
            pl.BlockSpec((1, tn), lambda i, j, k: (0, j)),
        ],
        out_specs=pl.BlockSpec((tm, tn), lambda i, j, k: (i, j)),
        scratch_shapes=[pltpu.VMEM((tm, tn), jnp.float32)],
        compiler_params=pltpu.CompilerParams(
            dimension_semantics=("parallel", "parallel", "arbitrary"),
            vmem_limit_bytes=VMEM_LIMIT,
        ),
    )(x2d, w, b.reshape(1, N))


# ----------------------------------------------------------------------------
# Kernel 2: flash-style causal attention.
# Arrays are (B*H, T, hd); grid = (B*H, T/tq, T/tkv) with the KV axis last.
# Kernel refs are 2-D (squeezed B*H dim). Online softmax state (m, l, acc)
# lives in VMEM scratch and is carried across the KV axis.
# ----------------------------------------------------------------------------
def _flash_attn_kernel(q_ref, k_ref, v_ref, o_ref, m_sc, l_sc, acc_sc, *, scale):
    qi = pl.program_id(1)
    ki = pl.program_id(2)

    @pl.when(ki == 0)
    def _init():
        m_sc[...] = jnp.full(m_sc.shape, -jnp.inf, m_sc.dtype)
        l_sc[...] = jnp.zeros_like(l_sc)
        acc_sc[...] = jnp.zeros_like(acc_sc)

    def _update(apply_mask):
        q = q_ref[...].astype(jnp.bfloat16)   # (tq, hd)
        k = k_ref[...].astype(jnp.bfloat16)   # (tkv, hd)
        v = v_ref[...].astype(jnp.bfloat16)   # (tkv, hd)

        # q @ k^T without an explicit transpose: contract the last dims.
        s = lax.dot_general(
            q, k, (((1,), (1,)), ((), ())),
            preferred_element_type=jnp.float32,
        ) * scale                              # (tq, tkv), f32

        if apply_mask:
            # Diagonal tile only (tq == tkv, same start offset): local iota mask.
            row = lax.broadcasted_iota(jnp.int32, s.shape, 0)
            col = lax.broadcasted_iota(jnp.int32, s.shape, 1)
            s = jnp.where(col <= row, s, -jnp.inf)

        m_prev = m_sc[...]                                      # (tq, 1)
        m_new = jnp.maximum(m_prev, jnp.max(s, axis=-1, keepdims=True))
        alpha = jnp.exp(m_prev - m_new)                         # f32 softmax math
        p = jnp.exp(s - m_new)
        l_sc[...] = alpha * l_sc[...] + jnp.sum(p, axis=-1, keepdims=True)
        acc_sc[...] = alpha * acc_sc[...] + jnp.dot(
            p.astype(jnp.bfloat16), v, preferred_element_type=jnp.float32
        )
        m_sc[...] = m_new

    # Causal tiling: skip tiles strictly above the diagonal; mask only on the
    # diagonal tile.
    @pl.when(ki < qi)
    def _below_diag():
        _update(apply_mask=False)

    @pl.when(ki == qi)
    def _diag():
        _update(apply_mask=True)

    @pl.when(ki == pl.num_programs(2) - 1)
    def _finalize():
        o_ref[...] = (
            acc_sc[...] * pl.reciprocal(l_sc[...], approx=True)
        ).astype(o_ref.dtype)


def flash_causal_attention(q, k, v, *, tq=128):
    BH, T, hd = q.shape
    tq = _pick_tile(T, tq)
    tkv = tq  # keep q/kv tiles equal so "ki == qi" identifies the diagonal tile
    nq, nkv = T // tq, T // tkv
    scale = 1.0 / math.sqrt(hd)

    q_spec = pl.BlockSpec((None, tq, hd), lambda bh, qi, ki: (bh, qi, 0))
    kv_spec = pl.BlockSpec((None, tkv, hd), lambda bh, qi, ki: (bh, ki, 0))
    o_spec = pl.BlockSpec((None, tq, hd), lambda bh, qi, ki: (bh, qi, 0))

    return pl.pallas_call(
        partial(_flash_attn_kernel, scale=scale),
        out_shape=jax.ShapeDtypeStruct((BH, T, hd), jnp.float32),
        grid=(BH, nq, nkv),
        in_specs=[q_spec, kv_spec, kv_spec],
        out_specs=o_spec,
        scratch_shapes=[
            pltpu.VMEM((tq, 1), jnp.float32),    # running max
            pltpu.VMEM((tq, 1), jnp.float32),    # running denominator
            pltpu.VMEM((tq, hd), jnp.float32),   # output accumulator
        ],
        compiler_params=pltpu.CompilerParams(
            dimension_semantics=("parallel", "parallel", "arbitrary"),
            vmem_limit_bytes=VMEM_LIMIT,
        ),
    )(q, k, v)


# ----------------------------------------------------------------------------
# Full forward pass of CasualSelfAttention (use_flash_attn semantics, no RoPE).
# ----------------------------------------------------------------------------
def causal_self_attention(x, params, n_head):
    B, T, C = x.shape
    hd = C // n_head

    # QKV projection (tiled matmul kernel).
    x2d = x.reshape(B * T, C)
    qkv = linear(x2d, params["w_attn"], params["b_attn"])        # (B*T, 3C)

    # Split heads. TODO(synk): fold these transposes into the attention
    # BlockSpecs (index heads directly in a (B, T, 3C) array) once head_dim is
    # a multiple of 128; sub-128 last-dim blocks would violate lane tiling.
    qkv = qkv.reshape(B, T, 3, n_head, hd)
    qkvh = jnp.transpose(qkv, (2, 0, 3, 1, 4))                   # (3, B, H, T, hd)
    q = qkvh[0].reshape(B * n_head, T, hd)
    k = qkvh[1].reshape(B * n_head, T, hd)
    v = qkvh[2].reshape(B * n_head, T, hd)

    # Flash-style causal attention.
    y = flash_causal_attention(q, k, v)                          # (B*H, T, hd)

    # Merge heads + output projection.
    y = y.reshape(B, n_head, T, hd).transpose(0, 2, 1, 3).reshape(B * T, C)
    y = linear(y, params["w_proj"], params["b_proj"])
    return y.reshape(B, T, C)


# ----------------------------------------------------------------------------
# Pure-JAX f32 reference (mirrors the PyTorch forward) for a sanity check.
# ----------------------------------------------------------------------------
def reference(x, params, n_head):
    B, T, C = x.shape
    hd = C // n_head
    qkv = x @ params["w_attn"] + params["b_attn"]
    q, k, v = jnp.split(qkv, 3, axis=2)
    q = q.reshape(B, T, n_head, hd).transpose(0, 2, 1, 3)
    k = k.reshape(B, T, n_head, hd).transpose(0, 2, 1, 3)
    v = v.reshape(B, T, n_head, hd).transpose(0, 2, 1, 3)
    att = jnp.einsum("bhqd,bhkd->bhqk", q, k) / math.sqrt(hd)
    mask = jnp.tril(jnp.ones((T, T), dtype=bool))
    att = jnp.where(mask, att, -jnp.inf)
    att = jax.nn.softmax(att, axis=-1)
    y = jnp.einsum("bhqk,bhkd->bhqd", att, v)
    y = y.transpose(0, 2, 1, 3).reshape(B, T, C)
    return y @ params["w_proj"] + params["b_proj"]


# ----------------------------------------------------------------------------
# Deterministic parameter init (nn.Linear-style uniform), stored transposed so
# that y = x @ W + b (W has shape (in_features, out_features)).
# ----------------------------------------------------------------------------
def init_params(key, n_embd):
    k1, k2, k3, k4 = jax.random.split(key, 4)
    bound = 1.0 / math.sqrt(n_embd)
    return {
        "w_attn": jax.random.uniform(k1, (n_embd, 3 * n_embd), jnp.float32, -bound, bound),
        "b_attn": jax.random.uniform(k2, (3 * n_embd,), jnp.float32, -bound, bound),
        "w_proj": jax.random.uniform(k3, (n_embd, n_embd), jnp.float32, -bound, bound),
        "b_proj": jax.random.uniform(k4, (n_embd,), jnp.float32, -bound, bound),
    }


def _run_case(key, B, T, n_embd, n_head, atol):
    key_x, key_p = jax.random.split(key)
    x = jax.random.normal(key_x, (B, T, n_embd), dtype=jnp.float32)
    params = init_params(key_p, n_embd)

    fwd = jax.jit(partial(causal_self_attention, n_head=n_head))
    y = fwd(x, params)
    jax.block_until_ready(y)

    y_ref = reference(x, params, n_head)
    assert y.shape == (B, T, n_embd)
    # bf16 MXU operands -> loosened tolerance vs. the f32 reference.
    assert jnp.allclose(y, y_ref, atol=atol, rtol=atol), "mismatch vs reference"


if __name__ == "__main__":
    key = jax.random.PRNGKey(0)
    k_small, k_big = jax.random.split(key)

    # Small shape consistent with the module (B=2, T=8, n_embd=32, n_head=4).
    _run_case(k_small, B=2, T=8, n_embd=32, n_head=4, atol=3e-2)

    # Moderate shape that exercises the tiled matmul grid, multi-KV-tile flash
    # accumulation and causal tile skipping (T=256 -> 2x2 q/kv tiles).
    _run_case(k_big, B=2, T=256, n_embd=256, n_head=4, atol=3e-2)

    print("KERNEL_OK")
</pallas_src>

<mosaic_0001>
module attributes {stable_mosaic.version = 11 : i64} {
  func.func @_linear_kernel(%arg0: i32, %arg1: i32, %arg2: i32, %arg3: memref<16x32xf32, #tpu.memory_space<vmem>>, %arg4: memref<32x96xf32, #tpu.memory_space<vmem>>, %arg5: memref<1x96xf32, #tpu.memory_space<vmem>>, %arg6: memref<16x96xf32, #tpu.memory_space<vmem>>, %arg7: memref<16x96xf32, #tpu.memory_space<vmem>>) attributes {dimension_semantics = [#tpu.dimension_semantics<parallel>, #tpu.dimension_semantics<parallel>, #tpu.dimension_semantics<arbitrary>], iteration_bounds = array<i64: 1, 1, 1>, scalar_prefetch = 0 : i64, scratch_operands = 1 : i64, tpu.core_type = #tpu.core_type<tc>, window_params = [{transform_indices = @transform_0, window_bounds = array<i64: 16, 32>}, {transform_indices = @transform_1, window_bounds = array<i64: 32, 96>}, {transform_indices = @transform_2, window_bounds = array<i64: 1, 96>}, {transform_indices = @transform_3, window_bounds = array<i64: 16, 96>}]} {
    %c0_i32 = arith.constant 0 : i32
    %0 = arith.cmpi eq, %arg2, %c0_i32 : i32
    %1 = arith.extui %0 : i1 to i32
    %c0_i32_0 = arith.constant 0 : i32
    %2 = arith.cmpi ne, %1, %c0_i32_0 : i32
    scf.if %2 {
      %cst_10 = arith.constant 0.000000e+00 : f32
      %14 = vector.broadcast %cst_10 : f32 to vector<16x96xf32>
      %c0_11 = arith.constant 0 : index
      %c0_12 = arith.constant 0 : index
      %15 = vector.load %arg7[%c0_11, %c0_12] : memref<16x96xf32, #tpu.memory_space<vmem>>, vector<16x96xf32>
      tpu.vector_store %arg7[%c0_11, %c0_12], %14 {strides = array<i32>} : memref<16x96xf32, #tpu.memory_space<vmem>>, vector<16x96xf32>,
    } else {
    }
    %c0 = arith.constant 0 : index
    %c0_1 = arith.constant 0 : index
    %3 = vector.load %arg7[%c0, %c0_1] : memref<16x96xf32, #tpu.memory_space<vmem>>, vector<16x96xf32>
    %c0_2 = arith.constant 0 : index
    %c0_3 = arith.constant 0 : index
    %4 = vector.load %arg3[%c0_2, %c0_3] : memref<16x32xf32, #tpu.memory_space<vmem>>, vector<16x32xf32>
    %5 = arith.truncf %4 : vector<16x32xf32> to vector<16x32xbf16>
    %c0_4 = arith.constant 0 : index
    %c0_5 = arith.constant 0 : index
    %6 = vector.load %arg4[%c0_4, %c0_5] : memref<32x96xf32, #tpu.memory_space<vmem>>, vector<32x96xf32>
    %7 = arith.truncf %6 : vector<32x96xf32> to vector<32x96xbf16>
    %cst = arith.constant dense<0.000000e+00> : vector<16x96xf32>
    %8 = tpu.matmul %5, %7, %cst {dimension_numbers = #tpu.dot_dimension_numbers<[1], [0], [0], [1], [0, 0, 1, 1], [], []>} : vector<16x32xbf16>, vector<32x96xbf16>, vector<16x96xf32> -> vector<16x96xf32>
    %9 = arith.addf %3, %8 : vector<16x96xf32>
    %c0_6 = arith.constant 0 : index
    %c0_7 = arith.constant 0 : index
    %10 = vector.load %arg7[%c0_6, %c0_7] : memref<16x96xf32, #tpu.memory_space<vmem>>, vector<16x96xf32>
    tpu.vector_store %arg7[%c0_6, %c0_7], %9 {strides = array<i32>} : memref<16x96xf32, #tpu.memory_space<vmem>>, vector<16x96xf32>,
    %c0_i32_8 = arith.constant 0 : i32
    %11 = arith.cmpi eq, %arg2, %c0_i32_8 : i32
    %12 = arith.extui %11 : i1 to i32
    %c0_i32_9 = arith.constant 0 : i32
    %13 = arith.cmpi ne, %12, %c0_i32_9 : i32
    scf.if %13 {
      %c0_10 = arith.constant 0 : index
      %c0_11 = arith.constant 0 : index
      %14 = vector.load %arg7[%c0_10, %c0_11] : memref<16x96xf32, #tpu.memory_space<vmem>>, vector<16x96xf32>
      %c0_12 = arith.constant 0 : index
      %c0_13 = arith.constant 0 : index
      %15 = vector.load %arg5[%c0_12, %c0_13] : memref<1x96xf32, #tpu.memory_space<vmem>>, vector<1x96xf32>
      %16 = vector.broadcast %15 : vector<1x96xf32> to vector<16x96xf32>
      %17 = arith.addf %14, %16 : vector<16x96xf32>
      %c0_14 = arith.constant 0 : index
      %c0_15 = arith.constant 0 : index
      %18 = vector.load %arg6[%c0_14, %c0_15] : memref<16x96xf32, #tpu.memory_space<vmem>>, vector<16x96xf32>
      tpu.vector_store %arg6[%c0_14, %c0_15], %17 {strides = array<i32>} : memref<16x96xf32, #tpu.memory_space<vmem>>, vector<16x96xf32>,
    } else {
    }
    return
  }
  func.func @transform_0(%arg0: i32, %arg1: i32, %arg2: i32) -> (i32, i32) {
    %c0_i32 = arith.constant 0 : i32
    return %arg0, %arg2 : i32, i32
  }
  func.func @transform_1(%arg0: i32, %arg1: i32, %arg2: i32) -> (i32, i32) {
    %c0_i32 = arith.constant 0 : i32
    return %arg2, %arg1 : i32, i32
  }
  func.func @transform_2(%arg0: i32, %arg1: i32, %arg2: i32) -> (i32, i32) {
    %c0_i32 = arith.constant 0 : i32
    %c0_i32_0 = arith.constant 0 : i32
    return %c0_i32, %arg1 : i32, i32
  }
  func.func @transform_3(%arg0: i32, %arg1: i32, %arg2: i32) -> (i32, i32) {
    %c0_i32 = arith.constant 0 : i32
    return %arg0, %arg1 : i32, i32
  }
}

module attributes {stable_mosaic.version = 11 : i64} {
  func.func @_flash_attn_kernel(%arg0: i32, %arg1: i32, %arg2: i32, %arg3: memref<1x8x8xf32, #tpu.memory_space<vmem>>, %arg4: memref<1x8x8xf32, #tpu.memory_space<vmem>>, %arg5: memref<1x8x8xf32, #tpu.memory_space<vmem>>, %arg6: memref<1x8x8xf32, #tpu.memory_space<vmem>>, %arg7: memref<8x1xf32, #tpu.memory_space<vmem>>, %arg8: memref<8x1xf32, #tpu.memory_space<vmem>>, %arg9: memref<8x8xf32, #tpu.memory_space<vmem>>) attributes {dimension_semantics = [#tpu.dimension_semantics<parallel>, #tpu.dimension_semantics<parallel>, #tpu.dimension_semantics<arbitrary>], iteration_bounds = array<i64: 8, 1, 1>, scalar_prefetch = 0 : i64, scratch_operands = 3 : i64, tpu.core_type = #tpu.core_type<tc>, window_params = [{transform_indices = @transform_0, window_bounds = array<i64: 1, 8, 8>}, {transform_indices = @transform_1, window_bounds = array<i64: 1, 8, 8>}, {transform_indices = @transform_2, window_bounds = array<i64: 1, 8, 8>}, {transform_indices = @transform_3, window_bounds = array<i64: 1, 8, 8>}]} {
    %c0_i32 = arith.constant 0 : i32
    %0 = arith.cmpi eq, %arg2, %c0_i32 : i32
    %1 = arith.extui %0 : i1 to i32
    %c0_i32_0 = arith.constant 0 : i32
    %2 = arith.cmpi ne, %1, %c0_i32_0 : i32
    scf.if %2 {
      %cst = arith.constant 0xFF800000 : f32
      %12 = vector.broadcast %cst : f32 to vector<8x1xf32>
      %c0 = arith.constant 0 : index
      %c0_5 = arith.constant 0 : index
      %13 = vector.load %arg7[%c0, %c0_5] : memref<8x1xf32, #tpu.memory_space<vmem>>, vector<8x1xf32>
      tpu.vector_store %arg7[%c0, %c0_5], %12 {strides = array<i32>} : memref<8x1xf32, #tpu.memory_space<vmem>>, vector<8x1xf32>,
      %cst_6 = arith.constant 0.000000e+00 : f32
      %14 = vector.broadcast %cst_6 : f32 to vector<8x1xf32>
      %c0_7 = arith.constant 0 : index
      %c0_8 = arith.constant 0 : index
      %15 = vector.load %arg8[%c0_7, %c0_8] : memref<8x1xf32, #tpu.memory_space<vmem>>, vector<8x1xf32>
      tpu.vector_store %arg8[%c0_7, %c0_8], %14 {strides = array<i32>} : memref<8x1xf32, #tpu.memory_space<vmem>>, vector<8x1xf32>,
      %cst_9 = arith.constant 0.000000e+00 : f32
      %16 = vector.broadcast %cst_9 : f32 to vector<8x8xf32>
      %c0_10 = arith.constant 0 : index
      %c0_11 = arith.constant 0 : index
      %17 = vector.load %arg9[%c0_10, %c0_11] : memref<8x8xf32, #tpu.memory_space<vmem>>, vector<8x8xf32>
      tpu.vector_store %arg9[%c0_10, %c0_11], %16 {strides = array<i32>} : memref<8x8xf32, #tpu.memory_space<vmem>>, vector<8x8xf32>,
    } else {
    }
    %3 = arith.cmpi slt, %arg2, %arg1 : i32
    %4 = arith.extui %3 : i1 to i32
    %c0_i32_1 = arith.constant 0 : i32
    %5 = arith.cmpi ne, %4, %c0_i32_1 : i32
    scf.if %5 {
      %c0 = arith.constant 0 : index
      %c0_5 = arith.constant 0 : index
      %c0_6 = arith.constant 0 : index
      %12 = vector.load %arg3[%c0, %c0_5, %c0_6] : memref<1x8x8xf32, #tpu.memory_space<vmem>>, vector<1x8x8xf32>
      %13 = vector.shape_cast %12 : vector<1x8x8xf32> to vector<8x8xf32>
      %14 = arith.truncf %13 : vector<8x8xf32> to vector<8x8xbf16>
      %c0_7 = arith.constant 0 : index
      %c0_8 = arith.constant 0 : index
      %c0_9 = arith.constant 0 : index
      %15 = vector.load %arg4[%c0_7, %c0_8, %c0_9] : memref<1x8x8xf32, #tpu.memory_space<vmem>>, vector<1x8x8xf32>
      %16 = vector.shape_cast %15 : vector<1x8x8xf32> to vector<8x8xf32>
      %17 = arith.truncf %16 : vector<8x8xf32> to vector<8x8xbf16>
      %c0_10 = arith.constant 0 : index
      %c0_11 = arith.constant 0 : index
      %c0_12 = arith.constant 0 : index
      %18 = vector.load %arg5[%c0_10, %c0_11, %c0_12] : memref<1x8x8xf32, #tpu.memory_space<vmem>>, vector<1x8x8xf32>
      %19 = vector.shape_cast %18 : vector<1x8x8xf32> to vector<8x8xf32>
      %20 = arith.truncf %19 : vector<8x8xf32> to vector<8x8xbf16>
      %cst = arith.constant dense<0.000000e+00> : vector<8x8xf32>
      %21 = tpu.matmul %14, %17, %cst {dimension_numbers = #tpu.dot_dimension_numbers<[1], [1], [0], [0], [0, 0, 1, 0], [], []>} : vector<8x8xbf16>, vector<8x8xbf16>, vector<8x8xf32> -> vector<8x8xf32>
      %cst_13 = arith.constant 0.353553385 : f32
      %22 = vector.broadcast %cst_13 : f32 to vector<8x8xf32>
      %23 = arith.mulf %21, %22 : vector<8x8xf32>
      %c0_14 = arith.constant 0 : index
      %c0_15 = arith.constant 0 : index
      %24 = vector.load %arg7[%c0_14, %c0_15] : memref<8x1xf32, #tpu.memory_space<vmem>>, vector<8x1xf32>
      %cst_16 = arith.constant dense<0xFF800000> : vector<8xf32>
      %25 = vector.multi_reduction <maximumf>, %23, %cst_16 [1] : vector<8x8xf32> to vector<8xf32>
      %26 = vector.shape_cast %25 : vector<8xf32> to vector<8x1xf32>
      %27 = arith.maximumf %24, %26 : vector<8x1xf32>
      %28 = arith.subf %24, %27 : vector<8x1xf32>
      %29 = math.exp %28 : vector<8x1xf32>
      %30 = vector.broadcast %27 : vector<8x1xf32> to vector<8x8xf32>
      %31 = arith.subf %23, %30 : vector<8x8xf32>
      %32 = math.exp %31 : vector<8x8xf32>
      %c0_17 = arith.constant 0 : index
      %c0_18 = arith.constant 0 : index
      %33 = vector.load %arg8[%c0_17, %c0_18] : memref<8x1xf32, #tpu.memory_space<vmem>>, vector<8x1xf32>
      %34 = arith.mulf %29, %33 : vector<8x1xf32>
      %cst_19 = arith.constant dense<0.000000e+00> : vector<8xf32>
      %35 = vector.multi_reduction <add>, %32, %cst_19 [1] : vector<8x8xf32> to vector<8xf32>
      %36 = vector.shape_cast %35 : vector<8xf32> to vector<8x1xf32>
      %37 = arith.addf %34, %36 : vector<8x1xf32>
      %c0_20 = arith.constant 0 : index
      %c0_21 = arith.constant 0 : index
      %38 = vector.load %arg8[%c0_20, %c0_21] : memref<8x1xf32, #tpu.memory_space<vmem>>, vector<8x1xf32>
      tpu.vector_store %arg8[%c0_20, %c0_21], %37 {strides = array<i32>} : memref<8x1xf32, #tpu.memory_space<vmem>>, vector<8x1xf32>,
      %c0_22 = arith.constant 0 : index
      %c0_23 = arith.constant 0 : index
      %39 = vector.load %arg9[%c0_22, %c0_23] : memref<8x8xf32, #tpu.memory_space<vmem>>, vector<8x8xf32>
      %40 = vector.broadcast %29 : vector<8x1xf32> to vector<8x8xf32>
      %41 = arith.mulf %40, %39 : vector<8x8xf32>
      %42 = arith.truncf %32 : vector<8x8xf32> to vector<8x8xbf16>
      %cst_24 = arith.constant dense<0.000000e+00> : vector<8x8xf32>
      %43 = tpu.matmul %42, %20, %cst_24 {dimension_numbers = #tpu.dot_dimension_numbers<[1], [0], [0], [1], [0, 0, 1, 1], [], []>} : vector<8x8xbf16>, vector<8x8xbf16>, vector<8x8xf32> -> vector<8x8xf32>
      %44 = arith.addf %41, %43 : vector<8x8xf32>
      %c0_25 = arith.constant 0 : index
      %c0_26 = arith.constant 0 : index
      %45 = vector.load %arg9[%c0_25, %c0_26] : memref<8x8xf32, #tpu.memory_space<vmem>>, vector<8x8xf32>
      tpu.vector_store %arg9[%c0_25, %c0_26], %44 {strides = array<i32>} : memref<8x8xf32, #tpu.memory_space<vmem>>, vector<8x8xf32>,
      %c0_27 = arith.constant 0 : index
      %c0_28 = arith.constant 0 : index
      %46 = vector.load %arg7[%c0_27, %c0_28] : memref<8x1xf32, #tpu.memory_space<vmem>>, vector<8x1xf32>
      tpu.vector_store %arg7[%c0_27, %c0_28], %27 {strides = array<i32>} : memref<8x1xf32, #tpu.memory_space<vmem>>, vector<8x1xf32>,
    } else {
    }
    %6 = arith.cmpi eq, %arg2, %arg1 : i32
    %7 = arith.extui %6 : i1 to i32
    %c0_i32_2 = arith.constant 0 : i32
    %8 = arith.cmpi ne, %7, %c0_i32_2 : i32
    scf.if %8 {
      %c0 = arith.constant 0 : index
      %c0_5 = arith.constant 0 : index
      %c0_6 = arith.constant 0 : index
      %12 = vector.load %arg3[%c0, %c0_5, %c0_6] : memref<1x8x8xf32, #tpu.memory_space<vmem>>, vector<1x8x8xf32>
      %13 = vector.shape_cast %12 : vector<1x8x8xf32> to vector<8x8xf32>
      %14 = arith.truncf %13 : vector<8x8xf32> to vector<8x8xbf16>
      %c0_7 = arith.constant 0 : index
      %c0_8 = arith.constant 0 : index
      %c0_9 = arith.constant 0 : index
      %15 = vector.load %arg4[%c0_7, %c0_8, %c0_9] : memref<1x8x8xf32, #tpu.memory_space<vmem>>, vector<1x8x8xf32>
      %16 = vector.shape_cast %15 : vector<1x8x8xf32> to vector<8x8xf32>
      %17 = arith.truncf %16 : vector<8x8xf32> to vector<8x8xbf16>
      %c0_10 = arith.constant 0 : index
      %c0_11 = arith.constant 0 : index
      %c0_12 = arith.constant 0 : index
      %18 = vector.load %arg5[%c0_10, %c0_11, %c0_12] : memref<1x8x8xf32, #tpu.memory_space<vmem>>, vector<1x8x8xf32>
      %19 = vector.shape_cast %18 : vector<1x8x8xf32> to vector<8x8xf32>
      %20 = arith.truncf %19 : vector<8x8xf32> to vector<8x8xbf16>
      %cst = arith.constant dense<0.000000e+00> : vector<8x8xf32>
      %21 = tpu.matmul %14, %17, %cst {dimension_numbers = #tpu.dot_dimension_numbers<[1], [1], [0], [0], [0, 0, 1, 0], [], []>} : vector<8x8xbf16>, vector<8x8xbf16>, vector<8x8xf32> -> vector<8x8xf32>
      %cst_13 = arith.constant 0.353553385 : f32
      %22 = vector.broadcast %cst_13 : f32 to vector<8x8xf32>
      %23 = arith.mulf %21, %22 : vector<8x8xf32>
      %24 = tpu.iota {dimensions = array<i32: 0>} : vector<8x8xi32>
      %25 = tpu.iota {dimensions = array<i32: 1>} : vector<8x8xi32>
      %26 = arith.cmpi sle, %25, %24 : vector<8x8xi32>
      %cst_14 = arith.constant 0xFF800000 : f32
      %27 = vector.broadcast %cst_14 : f32 to vector<8x8xf32>
      %28 = arith.select %26, %23, %27 : vector<8x8xi1>, vector<8x8xf32>
      %c0_15 = arith.constant 0 : index
      %c0_16 = arith.constant 0 : index
      %29 = vector.load %arg7[%c0_15, %c0_16] : memref<8x1xf32, #tpu.memory_space<vmem>>, vector<8x1xf32>
      %cst_17 = arith.constant dense<0xFF800000> : vector<8xf32>
      %30 = vector.multi_reduction <maximumf>, %28, %cst_17 [1] : vector<8x8xf32> to vector<8xf32>
      %31 = vector.shape_cast %30 : vector<8xf32> to vector<8x1xf32>
      %32 = arith.maximumf %29, %31 : vector<8x1xf32>
      %33 = arith.subf %29, %32 : vector<8x1xf32>
      %34 = math.exp %33 : vector<8x1xf32>
      %35 = vector.broadcast %32 : vector<8x1xf32> to vector<8x8xf32>
      %36 = arith.subf %28, %35 : vector<8x8xf32>
      %37 = math.exp %36 : vector<8x8xf32>
      %c0_18 = arith.constant 0 : index
      %c0_19 = arith.constant 0 : index
      %38 = vector.load %arg8[%c0_18, %c0_19] : memref<8x1xf32, #tpu.memory_space<vmem>>, vector<8x1xf32>
      %39 = arith.mulf %34, %38 : vector<8x1xf32>
      %cst_20 = arith.constant dense<0.000000e+00> : vector<8xf32>
      %40 = vector.multi_reduction <add>, %37, %cst_20 [1] : vector<8x8xf32> to vector<8xf32>
      %41 = vector.shape_cast %40 : vector<8xf32> to vector<8x1xf32>
      %42 = arith.addf %39, %41 : vector<8x1xf32>
      %c0_21 = arith.constant 0 : index
      %c0_22 = arith.constant 0 : index
      %43 = vector.load %arg8[%c0_21, %c0_22] : memref<8x1xf32, #tpu.memory_space<vmem>>, vector<8x1xf32>
      tpu.vector_store %arg8[%c0_21, %c0_22], %42 {strides = array<i32>} : memref<8x1xf32, #tpu.memory_space<vmem>>, vector<8x1xf32>,
      %c0_23 = arith.constant 0 : index
      %c0_24 = arith.constant 0 : index
      %44 = vector.load %arg9[%c0_23, %c0_24] : memref<8x8xf32, #tpu.memory_space<vmem>>, vector<8x8xf32>
      %45 = vector.broadcast %34 : vector<8x1xf32> to vector<8x8xf32>
      %46 = arith.mulf %45, %44 : vector<8x8xf32>
      %47 = arith.truncf %37 : vector<8x8xf32> to vector<8x8xbf16>
      %cst_25 = arith.constant dense<0.000000e+00> : vector<8x8xf32>
      %48 = tpu.matmul %47, %20, %cst_25 {dimension_numbers = #tpu.dot_dimension_numbers<[1], [0], [0], [1], [0, 0, 1, 1], [], []>} : vector<8x8xbf16>, vector<8x8xbf16>, vector<8x8xf32> -> vector<8x8xf32>
      %49 = arith.addf %46, %48 : vector<8x8xf32>
      %c0_26 = arith.constant 0 : index
      %c0_27 = arith.constant 0 : index
      %50 = vector.load %arg9[%c0_26, %c0_27] : memref<8x8xf32, #tpu.memory_space<vmem>>, vector<8x8xf32>
      tpu.vector_store %arg9[%c0_26, %c0_27], %49 {strides = array<i32>} : memref<8x8xf32, #tpu.memory_space<vmem>>, vector<8x8xf32>,
      %c0_28 = arith.constant 0 : index
      %c0_29 = arith.constant 0 : index
      %51 = vector.load %arg7[%c0_28, %c0_29] : memref<8x1xf32, #tpu.memory_space<vmem>>, vector<8x1xf32>
      tpu.vector_store %arg7[%c0_28, %c0_29], %32 {strides = array<i32>} : memref<8x1xf32, #tpu.memory_space<vmem>>, vector<8x1xf32>,
    } else {
    }
    %c0_i32_3 = arith.constant 0 : i32
    %9 = arith.cmpi eq, %arg2, %c0_i32_3 : i32
    %10 = arith.extui %9 : i1 to i32
    %c0_i32_4 = arith.constant 0 : i32
    %11 = arith.cmpi ne, %10, %c0_i32_4 : i32
    scf.if %11 {
      %c0 = arith.constant 0 : index
      %c0_5 = arith.constant 0 : index
      %12 = vector.load %arg9[%c0, %c0_5] : memref<8x8xf32, #tpu.memory_space<vmem>>, vector<8x8xf32>
      %c0_6 = arith.constant 0 : index
      %c0_7 = arith.constant 0 : index
      %13 = vector.load %arg8[%c0_6, %c0_7] : memref<8x1xf32, #tpu.memory_space<vmem>>, vector<8x1xf32>
      %14 = tpu.reciprocal %13 {approx = true} : vector<8x1xf32> -> vector<8x1xf32>
      %15 = vector.broadcast %14 : vector<8x1xf32> to vector<8x8xf32>
      %16 = arith.mulf %12, %15 : vector<8x8xf32>
      %c0_8 = arith.constant 0 : index
      %c0_9 = arith.constant 0 : index
      %c0_10 = arith.constant 0 : index
      %17 = vector.load %arg6[%c0_8, %c0_9, %c0_10] : memref<1x8x8xf32, #tpu.memory_space<vmem>>, vector<1x8x8xf32>
      %18 = vector.shape_cast %17 : vector<1x8x8xf32> to vector<8x8xf32>
      %19 = vector.shape_cast %16 : vector<8x8xf32> to vector<1x8x8xf32>
      tpu.vector_store %arg6[%c0_8, %c0_9, %c0_10], %19 {strides = array<i32>} : memref<1x8x8xf32, #tpu.memory_space<vmem>>, vector<1x8x8xf32>,
    } else {
    }
    return
  }
  func.func @transform_0(%arg0: i32, %arg1: i32, %arg2: i32) -> (i32, i32, i32) {
    %c0_i32 = arith.constant 0 : i32
    %c0_i32_0 = arith.constant 0 : i32
    return %arg0, %arg1, %c0_i32 : i32, i32, i32
  }
  func.func @transform_1(%arg0: i32, %arg1: i32, %arg2: i32) -> (i32, i32, i32) {
    %c0_i32 = arith.constant 0 : i32
    %c0_i32_0 = arith.constant 0 : i32
    return %arg0, %arg2, %c0_i32 : i32, i32, i32
  }
  func.func @transform_2(%arg0: i32, %arg1: i32, %arg2: i32) -> (i32, i32, i32) {
    %c0_i32 = arith.constant 0 : i32
    %c0_i32_0 = arith.constant 0 : i32
    return %arg0, %arg2, %c0_i32 : i32, i32, i32
  }
  func.func @transform_3(%arg0: i32, %arg1: i32, %arg2: i32) -> (i32, i32, i32) {
    %c0_i32 = arith.constant 0 : i32
    %c0_i32_0 = arith.constant 0 : i32
    return %arg0, %arg1, %c0_i32 : i32, i32, i32
  }
}

module attributes {stable_mosaic.version = 11 : i64} {
  func.func @_linear_kernel(%arg0: i32, %arg1: i32, %arg2: i32, %arg3: memref<16x32xf32, #tpu.memory_space<vmem>>, %arg4: memref<32x32xf32, #tpu.memory_space<vmem>>, %arg5: memref<1x32xf32, #tpu.memory_space<vmem>>, %arg6: memref<16x32xf32, #tpu.memory_space<vmem>>, %arg7: memref<16x32xf32, #tpu.memory_space<vmem>>) attributes {dimension_semantics = [#tpu.dimension_semantics<parallel>, #tpu.dimension_semantics<parallel>, #tpu.dimension_semantics<arbitrary>], iteration_bounds = array<i64: 1, 1, 1>, scalar_prefetch = 0 : i64, scratch_operands = 1 : i64, tpu.core_type = #tpu.core_type<tc>, window_params = [{transform_indices = @transform_0, window_bounds = array<i64: 16, 32>}, {transform_indices = @transform_1, window_bounds = array<i64: 32, 32>}, {transform_indices = @transform_2, window_bounds = array<i64: 1, 32>}, {transform_indices = @transform_3, window_bounds = array<i64: 16, 32>}]} {
    %c0_i32 = arith.constant 0 : i32
    %0 = arith.cmpi eq, %arg2, %c0_i32 : i32
    %1 = arith.extui %0 : i1 to i32
    %c0_i32_0 = arith.constant 0 : i32
    %2 = arith.cmpi ne, %1, %c0_i32_0 : i32
    scf.if %2 {
      %cst_10 = arith.constant 0.000000e+00 : f32
      %14 = vector.broadcast %cst_10 : f32 to vector<16x32xf32>
      %c0_11 = arith.constant 0 : index
      %c0_12 = arith.constant 0 : index
      %15 = vector.load %arg7[%c0_11, %c0_12] : memref<16x32xf32, #tpu.memory_space<vmem>>, vector<16x32xf32>
      tpu.vector_store %arg7[%c0_11, %c0_12], %14 {strides = array<i32>} : memref<16x32xf32, #tpu.memory_space<vmem>>, vector<16x32xf32>,
    } else {
    }
    %c0 = arith.constant 0 : index
    %c0_1 = arith.constant 0 : index
    %3 = vector.load %arg7[%c0, %c0_1] : memref<16x32xf32, #tpu.memory_space<vmem>>, vector<16x32xf32>
    %c0_2 = arith.constant 0 : index
    %c0_3 = arith.constant 0 : index
    %4 = vector.load %arg3[%c0_2, %c0_3] : memref<16x32xf32, #tpu.memory_space<vmem>>, vector<16x32xf32>
    %5 = arith.truncf %4 : vector<16x32xf32> to vector<16x32xbf16>
    %c0_4 = arith.constant 0 : index
    %c0_5 = arith.constant 0 : index
    %6 = vector.load %arg4[%c0_4, %c0_5] : memref<32x32xf32, #tpu.memory_space<vmem>>, vector<32x32xf32>
    %7 = arith.truncf %6 : vector<32x32xf32> to vector<32x32xbf16>
    %cst = arith.constant dense<0.000000e+00> : vector<16x32xf32>
    %8 = tpu.matmul %5, %7, %cst {dimension_numbers = #tpu.dot_dimension_numbers<[1], [0], [0], [1], [0, 0, 1, 1], [], []>} : vector<16x32xbf16>, vector<32x32xbf16>, vector<16x32xf32> -> vector<16x32xf32>
    %9 = arith.addf %3, %8 : vector<16x32xf32>
    %c0_6 = arith.constant 0 : index
    %c0_7 = arith.constant 0 : index
    %10 = vector.load %arg7[%c0_6, %c0_7] : memref<16x32xf32, #tpu.memory_space<vmem>>, vector<16x32xf32>
    tpu.vector_store %arg7[%c0_6, %c0_7], %9 {strides = array<i32>} : memref<16x32xf32, #tpu.memory_space<vmem>>, vector<16x32xf32>,
    %c0_i32_8 = arith.constant 0 : i32
    %11 = arith.cmpi eq, %arg2, %c0_i32_8 : i32
    %12 = arith.extui %11 : i1 to i32
    %c0_i32_9 = arith.constant 0 : i32
    %13 = arith.cmpi ne, %12, %c0_i32_9 : i32
    scf.if %13 {
      %c0_10 = arith.constant 0 : index
      %c0_11 = arith.constant 0 : index
      %14 = vector.load %arg7[%c0_10, %c0_11] : memref<16x32xf32, #tpu.memory_space<vmem>>, vector<16x32xf32>
      %c0_12 = arith.constant 0 : index
      %c0_13 = arith.constant 0 : index
      %15 = vector.load %arg5[%c0_12, %c0_13] : memref<1x32xf32, #tpu.memory_space<vmem>>, vector<1x32xf32>
      %16 = vector.broadcast %15 : vector<1x32xf32> to vector<16x32xf32>
      %17 = arith.addf %14, %16 : vector<16x32xf32>
      %c0_14 = arith.constant 0 : index
      %c0_15 = arith.constant 0 : index
      %18 = vector.load %arg6[%c0_14, %c0_15] : memref<16x32xf32, #tpu.memory_space<vmem>>, vector<16x32xf32>
      tpu.vector_store %arg6[%c0_14, %c0_15], %17 {strides = array<i32>} : memref<16x32xf32, #tpu.memory_space<vmem>>, vector<16x32xf32>,
    } else {
    }
    return
  }
  func.func @transform_0(%arg0: i32, %arg1: i32, %arg2: i32) -> (i32, i32) {
    %c0_i32 = arith.constant 0 : i32
    return %arg0, %arg2 : i32, i32
  }
  func.func @transform_1(%arg0: i32, %arg1: i32, %arg2: i32) -> (i32, i32) {
    %c0_i32 = arith.constant 0 : i32
    return %arg2, %arg1 : i32, i32
  }
  func.func @transform_2(%arg0: i32, %arg1: i32, %arg2: i32) -> (i32, i32) {
    %c0_i32 = arith.constant 0 : i32
    %c0_i32_0 = arith.constant 0 : i32
    return %c0_i32, %arg1 : i32, i32
  }
  func.func @transform_3(%arg0: i32, %arg1: i32, %arg2: i32) -> (i32, i32) {
    %c0_i32 = arith.constant 0 : i32
    return %arg0, %arg1 : i32, i32
  }
}

</mosaic_0001>

<llo_original>
// kernel: causal_self_attention.3
$region0: #{causal_self_attention.3}
  #allocation0 [shape = 'u32[]', space=smem, size = 0x4, offset = 0x4, fixed_abs, tag = 'smem constant byte address 0x4 - core index']
  #allocation1 [shape = 'u32[144,128]{1,0:T(1,128)}', space=vmem, size = 0x12000, scoped, tag = 'internal scratch']
  #allocation2 [shape = 'f32[16,96]{1,0:T(8,128)}', space=vmem, size = 0x2000, scoped, tag = 'scratch operand']
  %s0 = inlined_call_operand.hbm [shape: f32[16,32], index: 0, kind: input, shape index: {}]
  %s1 = inlined_call_operand.hbm [shape: f32[32,96], index: 1, kind: input, shape index: {}]
  %s2 = inlined_call_operand.vmem [shape: f32[1,96], index: 2, kind: input, shape index: {}]
  %s3 = inlined_call_operand.vmem [shape: f32[16,96], index: 3, kind: output, shape index: {}]
  %s4 = sld [smem:[#allocation0]]
  $region38: #{causal_self_attention.3} parent=0
    _
  %s6 = ssub.s32 1, %s4
  %s7 = scalar_select 0, %s6, %s4
  $region1: #{causal_self_attention.3} parent=0
    #allocation3 [shape = 'u8[8192]{0}', space=vmem, size = 0x2000, scoped, tag = 'input window, operand 0, single buffered']
    #allocation4 [shape = 's32[1]{0}', space=sflag, size = 0x4, scoped, tag = 'scoped memory for causal_self_attention.3']
    #allocation5 [shape = 'u8[16384]{0}', space=vmem, size = 0x4000, scoped, tag = 'input window, operand 1, single buffered']
    #allocation6 [shape = 's32[1]{0}', space=sflag, size = 0x4, scoped, tag = 'scoped memory for causal_self_attention.3']
    %8 = vsyncpa [#allocation4], 0
    %9 = vsyncpa [#allocation6], 0
    // Predicated region
    $region2: #{causal_self_attention.3} parent=1 // pred_check
      _
    $region3: #{causal_self_attention.3} parent=1 // pred_check_branch
      %11 = sbr.rel (0) target = $region5
    $region4: #{causal_self_attention.3} parent=1 // pred_region
      %s13 = ssub.s32 256, 256
      %14 = vsyncadd [#allocation4], %s13
      %s15 = sshll.u32 [#allocation3], 4
      %s16 = int_to_ptr.vmem [resolvable:$true] %s15
      %21 = dma.hbm_to_vmem [thread:$0]  %s0, 256, %s16, [#allocation4], 128, 128, 8
    $region5: #{causal_self_attention.3} parent=1 // pred_fallthru
      _
    // Predicated region
    $region6: #{causal_self_attention.3} parent=1 // pred_check
      _
    $region7: #{causal_self_attention.3} parent=1 // pred_check_branch
      %23 = sbr.rel (0) target = $region9
    $region8: #{causal_self_attention.3} parent=1 // pred_region
      %s25 = ssub.s32 512, 512
      %26 = vsyncadd [#allocation6], %s25
      %s27 = sshll.u32 [#allocation5], 4
      %s28 = int_to_ptr.vmem [resolvable:$true] %s27
      %33 = dma.hbm_to_vmem [thread:$0]  %s1, 512, %s28, [#allocation6], 128, 128, 8
    $region9: #{causal_self_attention.3} parent=1 // pred_fallthru
      _
    // Predicated region
    $region10: #{causal_self_attention.3} parent=1 // pred_check
      _
    $region11: #{causal_self_attention.3} parent=1 // pred_check_branch
      %35 = sbr.rel (0) target = $region13
    $region12: #{causal_self_attention.3} parent=1 // pred_region
      _
    $region13: #{causal_self_attention.3} parent=1 // pred_fallthru
      _
    // Predicated region
    $region14: #{causal_self_attention.3} parent=1 // pred_check
      _
    $region15: #{causal_self_attention.3} parent=1 // pred_check_branch
      %37 = sbr.rel (0) target = $region17
    $region16: #{causal_self_attention.3} parent=1 // pred_region
      %38 = dma.done [#allocation4], 256
    $region17: #{causal_self_attention.3} parent=1 // pred_fallthru
      _
    // Predicated region
    $region18: #{causal_self_attention.3} parent=1 // pred_check
      _
    $region19: #{causal_self_attention.3} parent=1 // pred_check_branch
      %40 = sbr.rel (0) target = $region21
    $region20: #{causal_self_attention.3} parent=1 // pred_region
      %41 = dma.done [#allocation6], 512
    $region21: #{causal_self_attention.3} parent=1 // pred_fallthru
      _
    %p43 = scmp.eq.s32.totalorder 0, 0
    // Predicated region
    $region22: #{causal_self_attention.3} parent=1 // pred_check
      %p44 = pneg %p43
    $region23: #{causal_self_attention.3} parent=1 // pred_check_branch
      %46 = sbr.rel (%p44) target = $region25
    $region24: #{causal_self_attention.3} parent=1 // pred_region
      %vm47 = vcmask 785408
      %48 = vst.msk [vmem:[#allocation2] sm:$0xff] %vm47, 0.0
      %49 = vst.msk [vmem:[#allocation2 + $0x8] sm:$0xff] %vm47, 0.0
    $region25: #{causal_self_attention.3} parent=1 // pred_fallthru
      _
    %v50 = vld [vmem:[#allocation2] sm:$0xff]
    %v51 = vld [vmem:[#allocation2 + $0x8] sm:$0xff]
    %v52 = vld [vmem:[#allocation3] sm:$0xff]
    %v53 = vld [vmem:[#allocation3 + $0x8] sm:$0xff]
    %v54 = vpack.c.bf16 %v53, %v52
    %v55 = vld [vmem:[#allocation5] sm:$0xff]
    %v56 = vld [vmem:[#allocation5 + $0x8] sm:$0xff]
    %v57 = vld [vmem:[#allocation5 + $0x10] sm:$0xff]
    %v58 = vld [vmem:[#allocation5 + $0x18] sm:$0xff]
    %v59 = vpack.c.bf16 %v56, %v55
    %v60 = vpack.c.bf16 %v58, %v57
    %vm61 = vcmask 261120
    %v63 = vsel %vm61, %v54, 0
    %65 = vmatprep.subr.bf16.mxu0 0
    %66 = vmatpush1.bf16.msra.mxu0 0
    %67 = vmatprep.subr.bf16.mxu0 0
    %68 = vmatpush1.bf16.msra.mxu0 0
    %69 = vmatprep.subr.bf16.mxu0 0
    %70 = vmatpush1.bf16.msra.mxu0 0
    %71 = vmatprep.subr.bf16.mxu0 0
    %72 = vmatpush1.bf16.msra.mxu0 0
    %73 = vmatprep.subr.bf16.mxu0 0
    %74 = vmatpush1.bf16.msra.mxu0 0
    %75 = vmatprep.subr.bf16.mxu0 0
    %76 = vmatpush1.bf16.msra.mxu0 0
    %77 = vmatprep.subr.bf16.mxu0 0
    %78 = vmatpush1.bf16.msra.mxu0 %v60
    %79 = vmatprep.subr.bf16.mxu0 0
    %80 = vmatpush1.bf16.msra.mxu0 %v59
    %81 = vmatprep.subr.bf16.mxu0 0
    %82 = vmatpush2.bf16.msra.mxu0 0
    %83 = vmatprep.subr.bf16.mxu0 0
    %84 = vmatpush2.bf16.msra.mxu0 0
    %85 = vmatprep.subr.bf16.mxu0 0
    %86 = vmatpush2.bf16.msra.mxu0 0
    %87 = vmatprep.subr.bf16.mxu0 0
    %88 = vmatpush2.bf16.msra.mxu0 0
    %89 = vmatprep.subr.bf16.mxu0 0
    %90 = vmatpush2.bf16.msra.mxu0 0
    %91 = vmatprep.subr.bf16.mxu0 0
    %92 = vmatpush2.bf16.msra.mxu0 0
    %93 = vmatprep.subr.bf16.mxu0 0
    %94 = vmatpush2.bf16.msra.mxu0 0
    %95 = vmatprep.subr.bf16.mxu0 0
    %96 = vmatpush2.bf16.msra.mxu0 0
    %97 = vmatprep.mubr.bf16.mxu0 0
    %98 = vmatmul.mubr.bf16.gmra.mxu0 %v63
    %v99 = vpop.f32.mrf.mxu0
    %v100 = vadd.f32 0.0, %v99
    %v101 = vpop.f32.mrf.mxu0
    %v102 = vpop.f32.mrf.mxu0
    %v103 = vadd.f32 0.0, %v102
    %v104 = vpop.f32.mrf.mxu0
    %105 = vdwg.mxu0
    %v106 = vadd.f32 %v50, %v100
    %v107 = vadd.f32 %v51, %v103
    %vm108 = vcmask 785408
    %109 = vst.msk [vmem:[#allocation2] sm:$0xff] %vm108, %v106
    %110 = vst.msk [vmem:[#allocation2 + $0x8] sm:$0xff] %vm108, %v107
    // Predicated region
    $region26: #{causal_self_attention.3} parent=1 // pred_check
      %p111 = pneg %p43
    $region27: #{causal_self_attention.3} parent=1 // pred_check_branch
      %113 = sbr.rel (%p111) target = $region29
    $region28: #{causal_self_attention.3} parent=1 // pred_region
      %v114 = vld [vmem:[#allocation2] sm:$0xff]
      %v115 = vld [vmem:[#allocation2 + $0x8] sm:$0xff]
      %v116 = vld [vmem:[%s2] sm:$0x1]
      %v118 = vlaneseq
      %v119 = vshrl.u32 %v118, 7
      %v120 = vsub.s32 0, %v119
      %v121 = vrot.slane %v116, %v120
      %v123 = vadd.f32 %v114, %v121
      %v124 = vadd.f32 %v115, %v121
      %125 = vst.msk [vmem:[%s3] sm:$0xff] %vm108, %v123
      %126 = vst.msk [vmem:[%s3 + $0x8] sm:$0xff] %vm108, %v124
    $region29: #{causal_self_attention.3} parent=1 // pred_fallthru
      _
    // Predicated region
    $region30: #{causal_self_attention.3} parent=1 // pred_check
      _
    $region31: #{causal_self_attention.3} parent=1 // pred_check_branch
      %128 = sbr.rel (0) target = $region33
    $region32: #{causal_self_attention.3} parent=1 // pred_region
      _
    $region33: #{causal_self_attention.3} parent=1 // pred_fallthru
      _
    // Predicated region
    $region34: #{causal_self_attention.3} parent=1 // pred_check
      _
    $region35: #{causal_self_attention.3} parent=1 // pred_check_branch
      %130 = sbr.rel (0) target = $region37
    $region36: #{causal_self_attention.3} parent=1 // pred_region
      _
    $region37: #{causal_self_attention.3} parent=1 // pred_fallthru
      _
    %131 = vsyncpa [#allocation4], 1
    %132 = vsyncpa [#allocation6], 1

// kernel: causal_self_attention.5
$region0: #{causal_self_attention.5}
  #allocation0 [shape = 'u32[]', space=smem, size = 0x4, offset = 0x4, fixed_abs, tag = 'smem constant byte address 0x4 - core index']
  #allocation1 [shape = 'u32[144,128]{1,0:T(1,128)}', space=vmem, size = 0x12000, scoped, tag = 'internal scratch']
  #allocation2 [shape = 'f32[16,32]{1,0:T(8,128)}', space=vmem, size = 0x2000, scoped, tag = 'scratch operand']
  %s0 = inlined_call_operand.vmem [shape: f32[16,32], index: 0, kind: input, shape index: {}]
  %s1 = inlined_call_operand.vmem [shape: f32[32,32], index: 1, kind: input, shape index: {}]
  %s2 = inlined_call_operand.vmem [shape: f32[1,32], index: 2, kind: input, shape index: {}]
  %s3 = inlined_call_operand.hbm [shape: f32[16,32], index: 3, kind: output, shape index: {}]
  %s4 = sld [smem:[#allocation0]]
  $region30: #{causal_self_attention.5} parent=0
    _
  %s6 = ssub.s32 1, %s4
  %s7 = scalar_select 0, %s6, %s4
  $region1: #{causal_self_attention.5} parent=0
    #allocation3 [shape = 'u8[8192]{0}', space=vmem, size = 0x2000, scoped, tag = 'output window, operand 0, single buffered']
    #allocation4 [shape = 's32[1]{0}', space=sflag, size = 0x4, scoped, tag = 'scoped memory for causal_self_attention.5']
    %8 = vsyncpa [#allocation4], 0
    // Predicated region
    $region2: #{causal_self_attention.5} parent=1 // pred_check
      _
    $region3: #{causal_self_attention.5} parent=1 // pred_check_branch
      %10 = sbr.rel (0) target = $region5
    $region4: #{causal_self_attention.5} parent=1 // pred_region
      _
    $region5: #{causal_self_attention.5} parent=1 // pred_fallthru
      _
    // Predicated region
    $region6: #{causal_self_attention.5} parent=1 // pred_check
      _
    $region7: #{causal_self_attention.5} parent=1 // pred_check_branch
      %12 = sbr.rel (0) target = $region9
    $region8: #{causal_self_attention.5} parent=1 // pred_region
      _
    $region9: #{causal_self_attention.5} parent=1 // pred_fallthru
      _
    // Predicated region
    $region10: #{causal_self_attention.5} parent=1 // pred_check
      _
    $region11: #{causal_self_attention.5} parent=1 // pred_check_branch
      %14 = sbr.rel (0) target = $region13
    $region12: #{causal_self_attention.5} parent=1 // pred_region
      _
    $region13: #{causal_self_attention.5} parent=1 // pred_fallthru
      _
    %p16 = scmp.eq.s32.totalorder 0, 0
    // Predicated region
    $region14: #{causal_self_attention.5} parent=1 // pred_check
      %p17 = pneg %p16
    $region15: #{causal_self_attention.5} parent=1 // pred_check_branch
      %19 = sbr.rel (%p17) target = $region17
    $region16: #{causal_self_attention.5} parent=1 // pred_region
      %vm20 = vcmask 261120
      %21 = vst.msk [vmem:[#allocation2] sm:$0xff] %vm20, 0.0
      %22 = vst.msk [vmem:[#allocation2 + $0x8] sm:$0xff] %vm20, 0.0
    $region17: #{causal_self_attention.5} parent=1 // pred_fallthru
      _
    %v23 = vld [vmem:[#allocation2] sm:$0xff]
    %v24 = vld [vmem:[#allocation2 + $0x8] sm:$0xff]
    %v25 = vld [vmem:[%s0] sm:$0xff]
    %v26 = vld [vmem:[%s0 + $0x8] sm:$0xff]
    %v27 = vpack.c.bf16 %v26, %v25
    %v28 = vld [vmem:[%s1] sm:$0xff]
    %v29 = vld [vmem:[%s1 + $0x8] sm:$0xff]
    %v30 = vld [vmem:[%s1 + $0x10] sm:$0xff]
    %v31 = vld [vmem:[%s1 + $0x18] sm:$0xff]
    %v32 = vpack.c.bf16 %v29, %v28
    %v33 = vpack.c.bf16 %v31, %v30
    %vm34 = vcmask 261120
    %v36 = vsel %vm34, %v27, 0
    %38 = vmatprep.subr.bf16.mxu0 0
    %39 = vmatpush1.bf16.msra.mxu0 0
    %40 = vmatprep.subr.bf16.mxu0 0
    %41 = vmatpush1.bf16.msra.mxu0 0
    %42 = vmatprep.subr.bf16.mxu0 0
    %43 = vmatpush1.bf16.msra.mxu0 0
    %44 = vmatprep.subr.bf16.mxu0 0
    %45 = vmatpush1.bf16.msra.mxu0 0
    %46 = vmatprep.subr.bf16.mxu0 0
    %47 = vmatpush1.bf16.msra.mxu0 0
    %48 = vmatprep.subr.bf16.mxu0 0
    %49 = vmatpush1.bf16.msra.mxu0 0
    %50 = vmatprep.subr.bf16.mxu0 0
    %51 = vmatpush1.bf16.msra.mxu0 %v33
    %52 = vmatprep.subr.bf16.mxu0 0
    %53 = vmatpush1.bf16.msra.mxu0 %v32
    %54 = vmatprep.subr.bf16.mxu0 0
    %55 = vmatpush2.bf16.msra.mxu0 0
    %56 = vmatprep.subr.bf16.mxu0 0
    %57 = vmatpush2.bf16.msra.mxu0 0
    %58 = vmatprep.subr.bf16.mxu0 0
    %59 = vmatpush2.bf16.msra.mxu0 0
    %60 = vmatprep.subr.bf16.mxu0 0
    %61 = vmatpush2.bf16.msra.mxu0 0
    %62 = vmatprep.subr.bf16.mxu0 0
    %63 = vmatpush2.bf16.msra.mxu0 0
    %64 = vmatprep.subr.bf16.mxu0 0
    %65 = vmatpush2.bf16.msra.mxu0 0
    %66 = vmatprep.subr.bf16.mxu0 0
    %67 = vmatpush2.bf16.msra.mxu0 0
    %68 = vmatprep.subr.bf16.mxu0 0
    %69 = vmatpush2.bf16.msra.mxu0 0
    %70 = vmatprep.mubr.bf16.mxu0 0
    %71 = vmatmul.mubr.bf16.gmra.mxu0 %v36
    %v72 = vpop.f32.mrf.mxu0
    %v73 = vadd.f32 0.0, %v72
    %v74 = vpop.f32.mrf.mxu0
    %v75 = vpop.f32.mrf.mxu0
    %v76 = vadd.f32 0.0, %v75
    %v77 = vpop.f32.mrf.mxu0
    %78 = vdwg.mxu0
    %v79 = vadd.f32 %v23, %v73
    %v80 = vadd.f32 %v24, %v76
    %81 = vst.msk [vmem:[#allocation2] sm:$0xff] %vm34, %v79
    %82 = vst.msk [vmem:[#allocation2 + $0x8] sm:$0xff] %vm34, %v80
    // Predicated region
    $region18: #{causal_self_attention.5} parent=1 // pred_check
      %p83 = pneg %p16
    $region19: #{causal_self_attention.5} parent=1 // pred_check_branch
      %85 = sbr.rel (%p83) target = $region21
    $region20: #{causal_self_attention.5} parent=1 // pred_region
      %v86 = vld [vmem:[#allocation2] sm:$0xff]
      %v87 = vld [vmem:[#allocation2 + $0x8] sm:$0xff]
      %v88 = vld [vmem:[%s2] sm:$0x1]
      %v90 = vlaneseq
      %v91 = vshrl.u32 %v90, 7
      %v92 = vsub.s32 0, %v91
      %v93 = vrot.slane %v88, %v92
      %v95 = vadd.f32 %v86, %v93
      %v96 = vadd.f32 %v87, %v93
      %97 = vst.msk [vmem:[#allocation3] sm:$0xff] %vm34, %v95
      %98 = vst.msk [vmem:[#allocation3 + $0x8] sm:$0xff] %vm34, %v96
    $region21: #{causal_self_attention.5} parent=1 // pred_fallthru
      _
    // Predicated region
    $region22: #{causal_self_attention.5} parent=1 // pred_check
      _
    $region23: #{causal_self_attention.5} parent=1 // pred_check_branch
      %100 = sbr.rel (0) target = $region25
    $region24: #{causal_self_attention.5} parent=1 // pred_region
      %s102 = ssub.s32 256, 256
      %103 = vsyncadd [#allocation4], %s102
      %s104 = sshll.u32 [#allocation3], 4
      %s105 = int_to_ptr.vmem [resolvable:$true] %s104
      %110 = dma.vmem_to_hbm [thread:$0]  %s105, 256, %s3, [#allocation4], 128, 128, 8
    $region25: #{causal_self_attention.5} parent=1 // pred_fallthru
      _
    // Predicated region
    $region26: #{causal_self_attention.5} parent=1 // pred_check
      _
    $region27: #{causal_self_attention.5} parent=1 // pred_check_branch
      %112 = sbr.rel (0) target = $region29
    $region28: #{causal_self_attention.5} parent=1 // pred_region
      %113 = dma.done [#allocation4], 256
    $region29: #{causal_self_attention.5} parent=1 // pred_fallthru
      _
    %114 = vsyncpa [#allocation4], 1

// kernel: causal_self_attention.4
$region0: #{causal_self_attention.4}
  #allocation0 [shape = 'u32[]', space=smem, size = 0x4, offset = 0x4, fixed_abs, tag = 'smem constant byte address 0x4 - core index']
  #allocation1 [shape = 'u32[144,128]{1,0:T(1,128)}', space=vmem, size = 0x12000, scoped, tag = 'internal scratch']
  #allocation2 [shape = 'f32[8,1]{1,0:T(8,128)}', space=vmem, size = 0x1000, scoped, tag = 'scratch operand']
  #allocation3 [shape = 'f32[8,1]{1,0:T(8,128)}', space=vmem, size = 0x1000, scoped, tag = 'scratch operand']
  #allocation4 [shape = 'f32[8,8]{1,0:T(8,128)}', space=vmem, size = 0x1000, scoped, tag = 'scratch operand']
  %s0 = inlined_call_operand.vmem [shape: f32[8,8,8], index: 0, kind: input, shape index: {}]
  %s1 = inlined_call_operand.vmem [shape: f32[8,8,8], index: 1, kind: input, shape index: {}]
  %s2 = inlined_call_operand.vmem [shape: f32[8,8,8], index: 2, kind: input, shape index: {}]
  %s3 = inlined_call_operand.vmem [shape: f32[8,8,8], index: 3, kind: output, shape index: {}]
  %s4 = sld [smem:[#allocation0]]
  $region61: #{causal_self_attention.4} parent=0
    _
  %s6 = ssub.s32 1, %s4
  %s7 = scalar_select 0, %s6, %s4
  loop: start=0, step=1, limit=10
  $region2: #{causal_self_attention.4} parent=0 // loop_pre_header
    _
  $region3: #{causal_self_attention.4} parent=0 // loop_header
    %s9 = sphi 0, %s13
    %p10 = scmp.ge.s32.totalorder %s9, 10
    %s16 = sphi 0, %s35
    %s17 = sphi 0, %s31
    %s18 = sphi 0, %s27
    %s19 = sphi 0, %s16
    %s20 = sphi 0, %s17
    %s21 = sphi 0, %s18
    %s22 = sphi 0, %s19
    %s23 = sphi 0, %s20
    %s24 = sphi 0, %s21
    %s40 = sphi 0, %s42
    %s43 = sphi 0, %s40
    %s44 = sphi 0, %s43
    %s60 = sphi 0, %s44
    %s68 = sphi 0, %s70
    %s71 = sphi 0, %s68
    %s72 = sphi 0, %s71
    %s88 = sphi 0, %s72
    %s96 = sphi 0, %s98
    %s99 = sphi 0, %s96
    %s100 = sphi 0, %s99
    %s116 = sphi 0, %s100
    %s124 = sphi 0, %s126
    %s127 = sphi 0, %s124
    %s128 = sphi 0, %s127
    %s144 = sphi 0, %s128
  $region4: #{causal_self_attention.4} parent=0 // loop_header_branch
    %12 = sbr.rel (%p10) target = $region8
  $region5: #{causal_self_attention.4} parent=0 // loop_body
    %s14 = ssub.s32 %s9, 1
    %s15 = ssub.s32 %s9, 2
    %s25 = sadd.s32 1, %s18
    %p26 = scmp.ge.s32.totalorder %s25, 1
    %s27 = scalar_select %p26, 0, %s25
    %s28 = sadd.s32 1, %s17
    %s29 = scalar_select %p26, %s28, %s17
    %p30 = scmp.ge.s32.totalorder %s29, 1
    %s31 = scalar_select %p30, 0, %s29
    %s32 = sadd.s32 1, %s16
    %s33 = scalar_select %p30, %s32, %s16
    %p34 = scmp.ge.s32.totalorder %s33, 8
    %s35 = scalar_select %p34, 0, %s33
    %s36 = ssub.s32 %s16, %s35
    %s37 = ssub.s32 %s17, %s31
    %s38 = sor.u32 %s36, %s37
    %p39 = scmp.eq.s32.totalorder %s38, 0
    %s41 = sadd.s32 %s40, 1
    %s42 = scalar_select %p39, %s40, %s41
    %p45 = pneg %p39
    %p46 = scmp.eq.s32.totalorder %s9, 7
    %p47 = por %p45, %p46
    %p48 = scmp.ne.s32.totalorder %s40, %s43
    %p49 = scmp.eq.s32.totalorder %s9, 0
    %p50 = por %p48, %p49
    %p51 = scmp.ne.s32.totalorder %s40, %s43
    %p52 = scmp.eq.s32.totalorder %s14, 7
    %p53 = por %p51, %p52
    %p54 = scmp.ne.s32.totalorder %s43, %s44
    %p55 = scmp.eq.s32.totalorder %s14, 0
    %p56 = por %p54, %p55
    %p57 = scmp.ne.s32.totalorder %s43, %s44
    %p58 = scmp.eq.s32.totalorder %s15, 7
    %p59 = por %p57, %p58
    %p61 = scmp.ne.s32.totalorder %s44, %s60
    %p62 = scmp.eq.s32.totalorder %s15, 0
    %p63 = por %p61, %p62
    %s64 = ssub.s32 %s16, %s35
    %s65 = ssub.s32 %s18, %s27
    %s66 = sor.u32 %s64, %s65
    %p67 = scmp.eq.s32.totalorder %s66, 0
    %s69 = sadd.s32 %s68, 1
    %s70 = scalar_select %p67, %s68, %s69
    %p73 = pneg %p67
    %p74 = scmp.eq.s32.totalorder %s9, 7
    %p75 = por %p73, %p74
    %p76 = scmp.ne.s32.totalorder %s68, %s71
    %p77 = scmp.eq.s32.totalorder %s9, 0
    %p78 = por %p76, %p77
    %p79 = scmp.ne.s32.totalorder %s68, %s71
    %p80 = scmp.eq.s32.totalorder %s14, 7
    %p81 = por %p79, %p80
    %p82 = scmp.ne.s32.totalorder %s71, %s72
    %p83 = scmp.eq.s32.totalorder %s14, 0
    %p84 = por %p82, %p83
    %p85 = scmp.ne.s32.totalorder %s71, %s72
    %p86 = scmp.eq.s32.totalorder %s15, 7
    %p87 = por %p85, %p86
    %p89 = scmp.ne.s32.totalorder %s72, %s88
    %p90 = scmp.eq.s32.totalorder %s15, 0
    %p91 = por %p89, %p90
    %s92 = ssub.s32 %s16, %s35
    %s93 = ssub.s32 %s18, %s27
    %s94 = sor.u32 %s92, %s93
    %p95 = scmp.eq.s32.totalorder %s94, 0
    %s97 = sadd.s32 %s96, 1
    %s98 = scalar_select %p95, %s96, %s97
    %p101 = pneg %p95
    %p102 = scmp.eq.s32.totalorder %s9, 7
    %p103 = por %p101, %p102
    %p104 = scmp.ne.s32.totalorder %s96, %s99
    %p105 = scmp.eq.s32.totalorder %s9, 0
    %p106 = por %p104, %p105
    %p107 = scmp.ne.s32.totalorder %s96, %s99
    %p108 = scmp.eq.s32.totalorder %s14, 7
    %p109 = por %p107, %p108
    %p110 = scmp.ne.s32.totalorder %s99, %s100
    %p111 = scmp.eq.s32.totalorder %s14, 0
    %p112 = por %p110, %p111
    %p113 = scmp.ne.s32.totalorder %s99, %s100
    %p114 = scmp.eq.s32.totalorder %s15, 7
    %p115 = por %p113, %p114
    %p117 = scmp.ne.s32.totalorder %s100, %s116
    %p118 = scmp.eq.s32.totalorder %s15, 0
    %p119 = por %p117, %p118
    %s120 = ssub.s32 %s16, %s35
    %s121 = ssub.s32 %s17, %s31
    %s122 = sor.u32 %s120, %s121
    %p123 = scmp.eq.s32.totalorder %s122, 0
    %s125 = sadd.s32 %s124, 1
    %s126 = scalar_select %p123, %s124, %s125
    %p129 = pneg %p123
    %p130 = scmp.eq.s32.totalorder %s9, 7
    %p131 = por %p129, %p130
    %p132 = scmp.ne.s32.totalorder %s124, %s127
    %p133 = scmp.eq.s32.totalorder %s9, 0
    %p134 = por %p132, %p133
    %p135 = scmp.ne.s32.totalorder %s124, %s127
    %p136 = scmp.eq.s32.totalorder %s14, 7
    %p137 = por %p135, %p136
    %p138 = scmp.ne.s32.totalorder %s127, %s128
    %p139 = scmp.eq.s32.totalorder %s14, 0
    %p140 = por %p138, %p139
    %p141 = scmp.ne.s32.totalorder %s127, %s128
    %p142 = scmp.eq.s32.totalorder %s15, 7
    %p143 = por %p141, %p142
    %p145 = scmp.ne.s32.totalorder %s128, %s144
    %p146 = scmp.eq.s32.totalorder %s15, 0
    %p147 = por %p145, %p146
    %p148 = scmp.le.s32.totalorder 1, %s9
    %p149 = scmp.lt.s32.totalorder %s9, 9
    %p150 = pnand %p148, %p149
    %p151 = pneg %p150
    // Predicated region
    $region9: #{causal_self_attention.4} parent=5 // pred_check
      _
    $region10: #{causal_self_attention.4} parent=5 // pred_check_branch
      %153 = sbr.rel (%p150) target = $region12
    $region11: #{causal_self_attention.4} parent=5 // pred_region
      %s154 = ssub.s32 %s9, 1
    $region12: #{causal_self_attention.4} parent=5 // pred_fallthru
      _
    %p155 = scmp.lt.s32.totalorder %s9, 8
    // Predicated region
    $region13: #{causal_self_attention.4} parent=5 // pred_check
      %p156 = pneg %p155
    $region14: #{causal_self_attention.4} parent=5 // pred_check_branch
      %158 = sbr.rel (%p156) target = $region16
    $region15: #{causal_self_attention.4} parent=5 // pred_region
      // Predicated region
      $region17: #{causal_self_attention.4} parent=15 // pred_check
        %p159 = pneg %p50
      $region18: #{causal_self_attention.4} parent=15 // pred_check_branch
        %161 = sbr.rel (%p159) target = $region20
      $region19: #{causal_self_attention.4} parent=15 // pred_region
        %p162 = scmp.lt.s32.totalorder %s16, 7
        %s163 = scalar_select %p162, %s16, 7
        %p164 = scmp.lt.s32.totalorder %s17, 0
        %s165 = scalar_select %p164, %s17, 0
        %s166 = sadd.s32 %s165, %s163
        %s167 = smul.addr %s166, 8
        %s168 = scalar_lea.vmem %s0, %s167
      $region20: #{causal_self_attention.4} parent=15 // pred_fallthru
        _
      // Predicated region
      $region21: #{causal_self_attention.4} parent=15 // pred_check
        %p169 = pneg %p78
      $region22: #{causal_self_attention.4} parent=15 // pred_check_branch
        %171 = sbr.rel (%p169) target = $region24
      $region23: #{causal_self_attention.4} parent=15 // pred_region
        %p172 = scmp.lt.s32.totalorder %s16, 7
        %s173 = scalar_select %p172, %s16, 7
        %p174 = scmp.lt.s32.totalorder %s18, 0
        %s175 = scalar_select %p174, %s18, 0
        %s176 = sadd.s32 %s175, %s173
        %s177 = smul.addr %s176, 8
        %s178 = scalar_lea.vmem %s1, %s177
      $region24: #{causal_self_attention.4} parent=15 // pred_fallthru
        _
      // Predicated region
      $region25: #{causal_self_attention.4} parent=15 // pred_check
        %p179 = pneg %p106
      $region26: #{causal_self_attention.4} parent=15 // pred_check_branch
        %181 = sbr.rel (%p179) target = $region28
      $region27: #{causal_self_attention.4} parent=15 // pred_region
        %p182 = scmp.lt.s32.totalorder %s16, 7
        %s183 = scalar_select %p182, %s16, 7
        %p184 = scmp.lt.s32.totalorder %s18, 0
        %s185 = scalar_select %p184, %s18, 0
        %s186 = sadd.s32 %s185, %s183
        %s187 = smul.addr %s186, 8
        %s188 = scalar_lea.vmem %s2, %s187
      $region28: #{causal_self_attention.4} parent=15 // pred_fallthru
        _
    $region16: #{causal_self_attention.4} parent=5 // pred_fallthru
      _
    %p189 = scmp.le.s32.totalorder 1, %s9
    %p190 = scmp.lt.s32.totalorder %s9, 9
    %p191 = pnand %p189, %p190
    %p192 = pneg %p191
    // Predicated region
    $region29: #{causal_self_attention.4} parent=5 // pred_check
      _
    $region30: #{causal_self_attention.4} parent=5 // pred_check_branch
      %194 = sbr.rel (%p191) target = $region32
    $region31: #{causal_self_attention.4} parent=5 // pred_region
      %s195 = ssub.s32 %s9, 1
      %p196 = scmp.lt.s32.totalorder %s19, 7
      %s197 = scalar_select %p196, %s19, 7
      %p198 = scmp.lt.s32.totalorder %s20, 0
      %s199 = scalar_select %p198, %s20, 0
      %s200 = sadd.s32 %s199, %s197
      %s201 = smul.addr %s200, 8
      %s202 = scalar_lea.vmem %s0, %s201
      %p203 = pneg %p56
      %p204 = pneg %p53
      %p205 = scmp.lt.s32.totalorder %s19, 7
      %s206 = scalar_select %p205, %s19, 7
      %p207 = scmp.lt.s32.totalorder %s21, 0
      %s208 = scalar_select %p207, %s21, 0
      %s209 = sadd.s32 %s208, %s206
      %s210 = smul.addr %s209, 8
      %s211 = scalar_lea.vmem %s1, %s210
      %p212 = pneg %p84
      %p213 = pneg %p81
      %p214 = scmp.lt.s32.totalorder %s19, 7
      %s215 = scalar_select %p214, %s19, 7
      %p216 = scmp.lt.s32.totalorder %s21, 0
      %s217 = scalar_select %p216, %s21, 0
      %s218 = sadd.s32 %s217, %s215
      %s219 = smul.addr %s218, 8
      %s220 = scalar_lea.vmem %s2, %s219
      %p221 = pneg %p112
      %p222 = pneg %p109
      %p223 = pneg %p140
      %p224 = pneg %p137
      %p225 = scmp.lt.s32.totalorder %s19, 7
      %s226 = scalar_select %p225, %s19, 7
      %p227 = scmp.lt.s32.totalorder %s20, 0
      %s228 = scalar_select %p227, %s20, 0
      %s229 = sadd.s32 %s228, %s226
      %s230 = smul.addr %s229, 8
      %s231 = scalar_lea.vmem %s3, %s230
      %p232 = scmp.lt.s32.totalorder %s19, 7
      %s233 = scalar_select %p232, %s19, 7
      %p234 = scmp.lt.s32.totalorder %s20, 0
      %s235 = scalar_select %p234, %s20, 0
      %s236 = sadd.s32 %s235, %s233
      %s237 = smul.addr %s236, 8
      %s238 = scalar_lea.vmem %s0, %s237
      %p239 = scmp.lt.s32.totalorder %s19, 7
      %s240 = scalar_select %p239, %s19, 7
      %p241 = scmp.lt.s32.totalorder %s21, 0
      %s242 = scalar_select %p241, %s21, 0
      %s243 = sadd.s32 %s242, %s240
      %s244 = smul.addr %s243, 8
      %s245 = scalar_lea.vmem %s1, %s244
      %p246 = scmp.lt.s32.totalorder %s19, 7
      %s247 = scalar_select %p246, %s19, 7
      %p248 = scmp.lt.s32.totalorder %s21, 0
      %s249 = scalar_select %p248, %s21, 0
      %s250 = sadd.s32 %s249, %s247
      %s251 = smul.addr %s250, 8
      %s252 = scalar_lea.vmem %s2, %s251
      %p253 = scmp.lt.s32.totalorder %s19, 7
      %s254 = scalar_select %p253, %s19, 7
      %p255 = scmp.lt.s32.totalorder %s20, 0
      %s256 = scalar_select %p255, %s20, 0
      %s257 = sadd.s32 %s256, %s254
      %s258 = smul.addr %s257, 8
      %s259 = scalar_lea.vmem %s3, %s258
      %p261 = scmp.eq.s32.totalorder %s21, 0
      // Predicated region
      $region33: #{causal_self_attention.4} parent=31 // pred_check
        %p262 = pneg %p261
      $region34: #{causal_self_attention.4} parent=31 // pred_check_branch
        %264 = sbr.rel (%p262) target = $region36
      $region35: #{causal_self_attention.4} parent=31 // pred_region
        %vm265 = vcmask 7168
        %266 = vst.msk [vmem:[#allocation2] sm:$0xff] %vm265, -inf
        %267 = vst.msk [vmem:[#allocation3] sm:$0xff] %vm265, 0.0
        %vm268 = vcmask 64512
        %269 = vst.msk [vmem:[#allocation4] sm:$0xff] %vm268, 0.0
      $region36: #{causal_self_attention.4} parent=31 // pred_fallthru
        _
      %p270 = scmp.lt.s32.totalorder %s21, %s20
      // Predicated region
      $region37: #{causal_self_attention.4} parent=31 // pred_check
        %p271 = pneg %p270
      $region38: #{causal_self_attention.4} parent=31 // pred_check_branch
        %273 = sbr.rel (%p271) target = $region40
      $region39: #{causal_self_attention.4} parent=31 // pred_region
        %v274 = vld [vmem:[%s238] sm:$0xff]
        %v275 = vpack.c.bf16 %v274, %v274
        %v276 = vld [vmem:[%s245] sm:$0xff]
        %v277 = vpack.c.bf16 %v276, %v276
        %v278 = vld [vmem:[%s252] sm:$0xff]
        %v279 = vpack.c.bf16 %v278, %v278
        %vm280 = vcmask 64512
        %v282 = vsel %vm280, %v275, 0
        %v285 = vsel %vm280, %v277, 0
        %287 = vmatprep.subr.bf16.mxu0 0
        %288 = vmatpush1.bf16.xpose.msra.mxu0 0
        %289 = vmatprep.subr.bf16.mxu0 0
        %290 = vmatpush1.bf16.xpose.msra.mxu0 0
        %291 = vmatprep.subr.bf16.mxu0 0
        %292 = vmatpush1.bf16.xpose.msra.mxu0 0
        %293 = vmatprep.subr.bf16.mxu0 0
        %294 = vmatpush1.bf16.xpose.msra.mxu0 0
        %295 = vmatprep.subr.bf16.mxu0 0
        %296 = vmatpush1.bf16.xpose.msra.mxu0 0
        %297 = vmatprep.subr.bf16.mxu0 0
        %298 = vmatpush1.bf16.xpose.msra.mxu0 0
        %299 = vmatprep.subr.bf16.mxu0 0
        %300 = vmatpush1.bf16.xpose.msra.mxu0 0
        %301 = vmatprep.subr.bf16.mxu0 0
        %302 = vmatpush1.bf16.xpose.msra.mxu0 %v285
        %303 = vmatprep.subr.bf16.mxu0 0
        %304 = vmatpush2.bf16.xpose.msra.mxu0 0
        %305 = vmatprep.subr.bf16.mxu0 0
        %306 = vmatpush2.bf16.xpose.msra.mxu0 0
        %307 = vmatprep.subr.bf16.mxu0 0
        %308 = vmatpush2.bf16.xpose.msra.mxu0 0
        %309 = vmatprep.subr.bf16.mxu0 0
        %310 = vmatpush2.bf16.xpose.msra.mxu0 0
        %311 = vmatprep.subr.bf16.mxu0 0
        %312 = vmatpush2.bf16.xpose.msra.mxu0 0
        %313 = vmatprep.subr.bf16.mxu0 0
        %314 = vmatpush2.bf16.xpose.msra.mxu0 0
        %315 = vmatprep.subr.bf16.mxu0 0
        %316 = vmatpush2.bf16.xpose.msra.mxu0 0
        %317 = vmatprep.subr.bf16.mxu0 0
        %318 = vmatpush2.bf16.xpose.msra.mxu0 0
        %319 = vmatprep.mubr.bf16.mxu0 0
        %320 = vmatmul.mubr.bf16.gmra.mxu0 %v282
        %v321 = vpop.f32.mrf.mxu0
        %v322 = vadd.f32 0.0, %v321
        %v323 = vpop.f32.mrf.mxu0
        %v324 = vpop.f32.mrf.mxu0
        %v325 = vpop.f32.mrf.mxu0
        %326 = vdwg.mxu0
        %v327 = vmul.f32 %v322, 0.35355338
        %v328 = vld [vmem:[#allocation2] sm:$0xff]
        %v329 = vsel %vm280, %v327, -inf
        %330 = vmax.xlane.f32.xlu0 %v329
        %v331 = vpop.xlane.xlu0 %330
        %v332 = vmax.f32 %v328, %v331
        %v333 = vsub.f32 %v328, %v332
        %v334 = vmul.f32 %v333, 1.442695
        %v335 = vpow.pop %v334
        %337 = vset.pattern.permute.xlu0 0
        %338 = vperm.xlu0 %337, %v332
        %v339 = vpop.permute.xlu0 %338
        %v341 = vsub.f32 %v327, %v339
        %v342 = vmul.f32 %v341, 1.442695
        %v343 = vpow.pop %v342
        %v344 = vld [vmem:[#allocation3] sm:$0xff]
        %v345 = vmul.f32 %v335, %v344
        %v346 = vsel %vm280, %v343, 0.0
        %347 = vadd.xlane.f32.xlu0 %v346
        %v348 = vpop.xlane.xlu0 %347
        %v349 = vadd.f32 %v345, %v348
        %vm350 = vcmask 7168
        %351 = vst.msk [vmem:[#allocation3] sm:$0xff] %vm350, %v349
        %v352 = vld [vmem:[#allocation4] sm:$0xff]
        %354 = vset.pattern.permute.xlu0 0
        %355 = vperm.xlu0 %354, %v335
        %v356 = vpop.permute.xlu0 %355
        %v358 = vmul.f32 %v356, %v352
        %v359 = vpack.c.bf16 %v343, %v343
        %v361 = vsel %vm280, %v359, 0
        %vm363 = vcmask 1043456
        %v365 = vsel %vm363, %v279, 0
        %367 = vmatprep.subr.bf16.mxu0 0
        %368 = vmatpush1.bf16.msra.mxu0 0
        %369 = vmatprep.subr.bf16.mxu0 0
        %370 = vmatpush1.bf16.msra.mxu0 0
        %371 = vmatprep.subr.bf16.mxu0 0
        %372 = vmatpush1.bf16.msra.mxu0 0
        %373 = vmatprep.subr.bf16.mxu0 0
        %374 = vmatpush1.bf16.msra.mxu0 0
        %375 = vmatprep.subr.bf16.mxu0 0
        %376 = vmatpush1.bf16.msra.mxu0 0
        %377 = vmatprep.subr.bf16.mxu0 0
        %378 = vmatpush1.bf16.msra.mxu0 0
        %379 = vmatprep.subr.bf16.mxu0 0
        %380 = vmatpush1.bf16.msra.mxu0 0
        %381 = vmatprep.subr.bf16.mxu0 0
        %382 = vmatpush1.bf16.msra.mxu0 %v365
        %383 = vmatprep.subr.bf16.mxu0 0
        %384 = vmatpush2.bf16.msra.mxu0 0
        %385 = vmatprep.subr.bf16.mxu0 0
        %386 = vmatpush2.bf16.msra.mxu0 0
        %387 = vmatprep.subr.bf16.mxu0 0
        %388 = vmatpush2.bf16.msra.mxu0 0
        %389 = vmatprep.subr.bf16.mxu0 0
        %390 = vmatpush2.bf16.msra.mxu0 0
        %391 = vmatprep.subr.bf16.mxu0 0
        %392 = vmatpush2.bf16.msra.mxu0 0
        %393 = vmatprep.subr.bf16.mxu0 0
        %394 = vmatpush2.bf16.msra.mxu0 0
        %395 = vmatprep.subr.bf16.mxu0 0
        %396 = vmatpush2.bf16.msra.mxu0 0
        %397 = vmatprep.subr.bf16.mxu0 0
        %398 = vmatpush2.bf16.msra.mxu0 0
        %399 = vmatprep.mubr.bf16.mxu0 0
        %400 = vmatmul.mubr.bf16.gmra.mxu0 %v361
        %v401 = vpop.f32.mrf.mxu0
        %v402 = vadd.f32 0.0, %v401
        %v403 = vpop.f32.mrf.mxu0
        %v404 = vpop.f32.mrf.mxu0
        %v405 = vpop.f32.mrf.mxu0
        %406 = vdwg.mxu0
        %v407 = vadd.f32 %v358, %v402
        %408 = vst.msk [vmem:[#allocation4] sm:$0xff] %vm280, %v407
        %409 = vst.msk [vmem:[#allocation2] sm:$0xff] %vm350, %v332
      $region40: #{causal_self_attention.4} parent=31 // pred_fallthru
        _
      %p410 = scmp.eq.s32.totalorder %s21, %s20
      // Predicated region
      $region41: #{causal_self_attention.4} parent=31 // pred_check
        %p411 = pneg %p410
      $region42: #{causal_self_attention.4} parent=31 // pred_check_branch
        %413 = sbr.rel (%p411) target = $region44
      $region43: #{causal_self_attention.4} parent=31 // pred_region
        %v414 = vld [vmem:[%s238] sm:$0xff]
        %v415 = vpack.c.bf16 %v414, %v414
        %v416 = vld [vmem:[%s245] sm:$0xff]
        %v417 = vpack.c.bf16 %v416, %v416
        %v418 = vld [vmem:[%s252] sm:$0xff]
        %v419 = vpack.c.bf16 %v418, %v418
        %vm420 = vcmask 64512
        %v422 = vsel %vm420, %v415, 0
        %v425 = vsel %vm420, %v417, 0
        %427 = vmatprep.subr.bf16.mxu0 0
        %428 = vmatpush1.bf16.xpose.msra.mxu0 0
        %429 = vmatprep.subr.bf16.mxu0 0
        %430 = vmatpush1.bf16.xpose.msra.mxu0 0
        %431 = vmatprep.subr.bf16.mxu0 0
        %432 = vmatpush1.bf16.xpose.msra.mxu0 0
        %433 = vmatprep.subr.bf16.mxu0 0
        %434 = vmatpush1.bf16.xpose.msra.mxu0 0
        %435 = vmatprep.subr.bf16.mxu0 0
        %436 = vmatpush1.bf16.xpose.msra.mxu0 0
        %437 = vmatprep.subr.bf16.mxu0 0
        %438 = vmatpush1.bf16.xpose.msra.mxu0 0
        %439 = vmatprep.subr.bf16.mxu0 0
        %440 = vmatpush1.bf16.xpose.msra.mxu0 0
        %441 = vmatprep.subr.bf16.mxu0 0
        %442 = vmatpush1.bf16.xpose.msra.mxu0 %v425
        %443 = vmatprep.subr.bf16.mxu0 0
        %444 = vmatpush2.bf16.xpose.msra.mxu0 0
        %445 = vmatprep.subr.bf16.mxu0 0
        %446 = vmatpush2.bf16.xpose.msra.mxu0 0
        %447 = vmatprep.subr.bf16.mxu0 0
        %448 = vmatpush2.bf16.xpose.msra.mxu0 0
        %449 = vmatprep.subr.bf16.mxu0 0
        %450 = vmatpush2.bf16.xpose.msra.mxu0 0
        %451 = vmatprep.subr.bf16.mxu0 0
        %452 = vmatpush2.bf16.xpose.msra.mxu0 0
        %453 = vmatprep.subr.bf16.mxu0 0
        %454 = vmatpush2.bf16.xpose.msra.mxu0 0
        %455 = vmatprep.subr.bf16.mxu0 0
        %456 = vmatpush2.bf16.xpose.msra.mxu0 0
        %457 = vmatprep.subr.bf16.mxu0 0
        %458 = vmatpush2.bf16.xpose.msra.mxu0 0
        %459 = vmatprep.mubr.bf16.mxu0 0
        %460 = vmatmul.mubr.bf16.gmra.mxu0 %v422
        %v461 = vpop.f32.mrf.mxu0
        %v462 = vadd.f32 0.0, %v461
        %v463 = vpop.f32.mrf.mxu0
        %v464 = vpop.f32.mrf.mxu0
        %v465 = vpop.f32.mrf.mxu0
        %466 = vdwg.mxu0
        %v467 = vmul.f32 %v462, 0.35355338
        %v468 = vlaneseq
        %v469 = vshrl.u32 %v468, 7
        %v470 = vlaneseq
        %v471 = vand.u32 %v470, 127
        %vm472 = vcmp.le.s32.totalorder %v471, %v469
        %v473 = vsel %vm472, %v467, -inf
        %v474 = vld [vmem:[#allocation2] sm:$0xff]
        %v475 = vsel %vm420, %v473, -inf
        %476 = vmax.xlane.f32.xlu0 %v475
        %v477 = vpop.xlane.xlu0 %476
        %v478 = vmax.f32 %v474, %v477
        %v479 = vsub.f32 %v474, %v478
        %v480 = vmul.f32 %v479, 1.442695
        %v481 = vpow.pop %v480
        %483 = vset.pattern.permute.xlu0 0
        %484 = vperm.xlu0 %483, %v478
        %v485 = vpop.permute.xlu0 %484
        %v487 = vsub.f32 %v473, %v485
        %v488 = vmul.f32 %v487, 1.442695
        %v489 = vpow.pop %v488
        %v490 = vld [vmem:[#allocation3] sm:$0xff]
        %v491 = vmul.f32 %v481, %v490
        %v492 = vsel %vm420, %v489, 0.0
        %493 = vadd.xlane.f32.xlu0 %v492
        %v494 = vpop.xlane.xlu0 %493
        %v495 = vadd.f32 %v491, %v494
        %vm496 = vcmask 7168
        %497 = vst.msk [vmem:[#allocation3] sm:$0xff] %vm496, %v495
        %v498 = vld [vmem:[#allocation4] sm:$0xff]
        %500 = vset.pattern.permute.xlu0 0
        %501 = vperm.xlu0 %500, %v481
        %v502 = vpop.permute.xlu0 %501
        %v504 = vmul.f32 %v502, %v498
        %v505 = vpack.c.bf16 %v489, %v489
        %v507 = vsel %vm420, %v505, 0
        %vm509 = vcmask 1043456
        %v511 = vsel %vm509, %v419, 0
        %513 = vmatprep.subr.bf16.mxu0 0
        %514 = vmatpush1.bf16.msra.mxu0 0
        %515 = vmatprep.subr.bf16.mxu0 0
        %516 = vmatpush1.bf16.msra.mxu0 0
        %517 = vmatprep.subr.bf16.mxu0 0
        %518 = vmatpush1.bf16.msra.mxu0 0
        %519 = vmatprep.subr.bf16.mxu0 0
        %520 = vmatpush1.bf16.msra.mxu0 0
        %521 = vmatprep.subr.bf16.mxu0 0
        %522 = vmatpush1.bf16.msra.mxu0 0
        %523 = vmatprep.subr.bf16.mxu0 0
        %524 = vmatpush1.bf16.msra.mxu0 0
        %525 = vmatprep.subr.bf16.mxu0 0
        %526 = vmatpush1.bf16.msra.mxu0 0
        %527 = vmatprep.subr.bf16.mxu0 0
        %528 = vmatpush1.bf16.msra.mxu0 %v511
        %529 = vmatprep.subr.bf16.mxu0 0
        %530 = vmatpush2.bf16.msra.mxu0 0
        %531 = vmatprep.subr.bf16.mxu0 0
        %532 = vmatpush2.bf16.msra.mxu0 0
        %533 = vmatprep.subr.bf16.mxu0 0
        %534 = vmatpush2.bf16.msra.mxu0 0
        %535 = vmatprep.subr.bf16.mxu0 0
        %536 = vmatpush2.bf16.msra.mxu0 0
        %537 = vmatprep.subr.bf16.mxu0 0
        %538 = vmatpush2.bf16.msra.mxu0 0
        %539 = vmatprep.subr.bf16.mxu0 0
        %540 = vmatpush2.bf16.msra.mxu0 0
        %541 = vmatprep.subr.bf16.mxu0 0
        %542 = vmatpush2.bf16.msra.mxu0 0
        %543 = vmatprep.subr.bf16.mxu0 0
        %544 = vmatpush2.bf16.msra.mxu0 0
        %545 = vmatprep.mubr.bf16.mxu0 0
        %546 = vmatmul.mubr.bf16.gmra.mxu0 %v507
        %v547 = vpop.f32.mrf.mxu0
        %v548 = vadd.f32 0.0, %v547
        %v549 = vpop.f32.mrf.mxu0
        %v550 = vpop.f32.mrf.mxu0
        %v551 = vpop.f32.mrf.mxu0
        %552 = vdwg.mxu0
        %v553 = vadd.f32 %v504, %v548
        %554 = vst.msk [vmem:[#allocation4] sm:$0xff] %vm420, %v553
        %555 = vst.msk [vmem:[#allocation2] sm:$0xff] %vm496, %v478
      $region44: #{causal_self_attention.4} parent=31 // pred_fallthru
        _
      // Predicated region
      $region45: #{causal_self_attention.4} parent=31 // pred_check
        %p556 = pneg %p261
      $region46: #{causal_self_attention.4} parent=31 // pred_check_branch
        %558 = sbr.rel (%p556) target = $region48
      $region47: #{causal_self_attention.4} parent=31 // pred_region
        %v559 = vld [vmem:[#allocation4] sm:$0xff]
        %v560 = vld [vmem:[#allocation3] sm:$0xff]
        %v561 = vrcp.pop %v560
        %563 = vset.pattern.permute.xlu0 0
        %564 = vperm.xlu0 %563, %v561
        %v565 = vpop.permute.xlu0 %564
        %v567 = vmul.f32 %v559, %v565
        %vm568 = vcmask 64512
        %569 = vst.msk [vmem:[%s259] sm:$0xff] %vm568, %v567
      $region48: #{causal_self_attention.4} parent=31 // pred_fallthru
        _
      %p570 = scmp.lt.s32.totalorder %s19, 7
      %s571 = scalar_select %p570, %s19, 7
      %p572 = scmp.lt.s32.totalorder %s20, 0
      %s573 = scalar_select %p572, %s20, 0
      %s574 = sadd.s32 %s573, %s571
      %s575 = smul.addr %s574, 8
      %s576 = scalar_lea.vmem %s3, %s575
      // Predicated region
      $region49: #{causal_self_attention.4} parent=31 // pred_check
        %p577 = pneg %p137
      $region50: #{causal_self_attention.4} parent=31 // pred_check_branch
        %579 = sbr.rel (%p577) target = $region52
      $region51: #{causal_self_attention.4} parent=31 // pred_region
        _
      $region52: #{causal_self_attention.4} parent=31 // pred_fallthru
        _
    $region32: #{causal_self_attention.4} parent=5 // pred_fallthru
      _
    %p580 = scmp.le.s32.totalorder 2, %s9
    // Predicated region
    $region53: #{causal_self_attention.4} parent=5 // pred_check
      %p581 = pneg %p580
    $region54: #{causal_self_attention.4} parent=5 // pred_check_branch
      %583 = sbr.rel (%p581) target = $region56
    $region55: #{causal_self_attention.4} parent=5 // pred_region
      %s584 = ssub.s32 %s9, 2
      // Predicated region
      $region57: #{causal_self_attention.4} parent=55 // pred_check
        %p585 = pneg %p143
      $region58: #{causal_self_attention.4} parent=55 // pred_check_branch
        %587 = sbr.rel (%p585) target = $region60
      $region59: #{causal_self_attention.4} parent=55 // pred_region
        %p588 = scmp.lt.s32.totalorder %s22, 7
        %s589 = scalar_select %p588, %s22, 7
        %p590 = scmp.lt.s32.totalorder %s23, 0
        %s591 = scalar_select %p590, %s23, 0
        %s592 = sadd.s32 %s591, %s589
        %s593 = smul.addr %s592, 8
        %s594 = scalar_lea.vmem %s3, %s593
      $region60: #{causal_self_attention.4} parent=55 // pred_fallthru
        _
    $region56: #{causal_self_attention.4} parent=5 // pred_fallthru
      _
  $region6: #{causal_self_attention.4} parent=0 // loop_footer
    %s13 = sadd.s32 1, %s9
  $region7: #{causal_self_attention.4} parent=0 // loop_footer_branch
    %8 = sbr.rel target = $region3
  $region8: #{causal_self_attention.4} parent=0 // loop_exit
    _

</llo_original>
